<compile_context>
chip_gen: v6e
topology: v6e:2x2x1
jax: 0.10.0
libtpu: 0.0.40
codegen_flags: <defaults>
</compile_context>

<pallas_src>
import jax
import jax.numpy as jnp
from jax.experimental import pallas as pl
from jax.experimental.pallas import tpu as pltpu


def _round_up(x, m):
    return ((x + m - 1) // m) * m


def _actor_kernel(s_ref, w1_ref, b1_ref, w2_ref, b2_ref, w3_ref, b3_ref,
                  mean_ref):
    # fc1 + ReLU   (bf16 MXU operands, f32 accumulation, f32 elementwise)
    # If the producer of s already emits bf16, this astype is a no-op.
    x = s_ref[...].astype(jnp.bfloat16)
    h1 = jnp.dot(x, w1_ref[...], preferred_element_type=jnp.float32) + b1_ref[...]
    h1 = jnp.maximum(h1, 0.0)
    # fc2 + ReLU
    h2 = jnp.dot(h1.astype(jnp.bfloat16), w2_ref[...],
                 preferred_element_type=jnp.float32) + b2_ref[...]
    h2 = jnp.maximum(h2, 0.0)
    # fc3 + Tanh.  w3/b3 are kept in f32 (fc3 is a tiny fraction of the FLOPs)
    # for tight numerical parity with the f32 PyTorch module.
    h3 = jnp.dot(h2, w3_ref[...], preferred_element_type=jnp.float32) + b3_ref[...]
    mean_ref[...] = jnp.tanh(h3).astype(mean_ref.dtype)


def actor_forward(s, params, *, batch_tile=1024, mean_dtype=jnp.bfloat16,
                  vmem_limit_bytes=None):
    """Fused Actor forward. Returns (mean[B, A], std[A]).

    batch_tile: rows per grid step.  1024 amortizes the ~0.35 us per-step
    overhead and fits comfortably under every generation's default scoped VMEM
    limit.  Larger tiles auto-set an explicit vmem_limit_bytes.
    """
    w1, b1 = params["w1"], params["b1"]
    w2, b2 = params["w2"], params["b2"]
    w3, b3 = params["w3"], params["b3"]
    log_std = params["log_std"]

    B, S = s.shape
    H1 = w1.shape[1]
    H2 = w2.shape[1]
    A = w3.shape[1]

    # Batch tiling: TB rows per grid step (multiple of 16 for sublane
    # alignment of both the f32 state tile and the bf16 mean tile).
    TB = _round_up(min(batch_tile, B), 16)
    n_tiles = pl.cdiv(B, TB)
    Bp = n_tiles * TB
    if Bp != B:
        s = jnp.pad(s, ((0, Bp - B), (0, 0)))

    # When the tile is pushed past 1024 rows, raise the scoped VMEM limit
    # explicitly (v5e default is 16 MiB).  ~12 KB/row is a generous bound for
    # the live intermediates + double-buffered stream tiles; 2 MiB covers the
    # resident weights.  Cap at 56 MiB so it stays inside v7x's 64 MiB VMEM.
    if vmem_limit_bytes is None and TB > 1024:
        vmem_limit_bytes = min(2 * 1024 * 1024 + TB * 12 * 1024,
                               56 * 1024 * 1024)

    # Constant block index -> the array stays resident in VMEM across steps.
    # TODO(synk): try pipeline_mode=pl.Buffered(1) here to avoid
    # double-buffering the resident weights (small VMEM saving on v7x).
    resident = lambda shape: pl.BlockSpec(shape, lambda i: (0, 0))

    mean_p = pl.pallas_call(
        _actor_kernel,
        grid=(n_tiles,),
        in_specs=[
            pl.BlockSpec((TB, S), lambda i: (i, 0)),   # state tile (streamed)
            resident((S, H1)), resident((1, H1)),      # fc1 weight / bias (bf16/f32)
            resident((H1, H2)), resident((1, H2)),     # fc2 weight / bias (bf16/f32)
            resident((H2, A)), resident((1, A)),       # fc3 weight / bias (f32)
        ],
        out_specs=pl.BlockSpec((TB, A), lambda i: (i, 0)),   # mean tile (streamed)
        out_shape=jax.ShapeDtypeStruct((Bp, A), mean_dtype),
        compiler_params=pltpu.CompilerParams(
            # std is out of the kernel, so the batch axis carries no revisited
            # output block -> fully parallel (v7x megacore shards it).
            dimension_semantics=("parallel",),
            vmem_limit_bytes=vmem_limit_bytes,
        ),
    )(s, w1, b1, w2, b2, w3, b3)

    # std is batch-independent (A elements of pure elementwise work): hoisted
    # out of the kernel so the grid axis can be parallel.
    std = jnp.clip(jnp.exp(log_std.astype(jnp.float32)), 0.001, 1.0)

    return mean_p[:B], std


def init_actor_params(key, state_size, action_size, hidden1=400, hidden2=300):
    """f32 'master' params mirroring Actor.__init__ / init_weights (unpadded)."""
    k = jax.random.split(key, 7)
    # fc1: weight ~ U(-1/state_size, 1/state_size); bias keeps default Linear init
    w1 = jax.random.uniform(k[0], (state_size, hidden1), jnp.float32,
                            -1.0 / state_size, 1.0 / state_size)
    b1 = jax.random.uniform(k[1], (hidden1,), jnp.float32,
                            -1.0 / state_size ** 0.5, 1.0 / state_size ** 0.5)
    # fc2: weight ~ U(-1/400, 1/400); bias default
    w2 = jax.random.uniform(k[2], (hidden1, hidden2), jnp.float32,
                            -1.0 / 400.0, 1.0 / 400.0)
    b2 = jax.random.uniform(k[3], (hidden2,), jnp.float32,
                            -1.0 / hidden1 ** 0.5, 1.0 / hidden1 ** 0.5)
    # fc3: weight & bias ~ U(-0.003, 0.003)
    w3 = jax.random.uniform(k[4], (hidden2, action_size), jnp.float32, -0.003, 0.003)
    b3 = jax.random.uniform(k[5], (action_size,), jnp.float32, -0.003, 0.003)
    # log_std ~ N(0, 1)
    log_std = jax.random.normal(k[6], (action_size,), jnp.float32)
    return {"w1": w1, "b1": b1, "w2": w2, "b2": b2,
            "w3": w3, "b3": b3, "log_std": log_std}


def prepare_kernel_params(masters):
    """Pad hidden dims to lane multiples (128); cast fc1/fc2 weights to bf16.

    Zero padding is numerically inert: padded h1/h2 lanes are relu(0 + 0) = 0
    and contribute nothing downstream.  fc3 weight/bias and biases stay f32.
    """
    w1, b1 = masters["w1"], masters["b1"]
    w2, b2 = masters["w2"], masters["b2"]
    w3, b3 = masters["w3"], masters["b3"]
    S, H1 = w1.shape
    H2 = w2.shape[1]
    A = w3.shape[1]
    H1P = _round_up(H1, 128)   # 400 -> 512
    H2P = _round_up(H2, 128)   # 300 -> 384

    pad2 = lambda w, r, c: jnp.pad(w, ((0, r - w.shape[0]), (0, c - w.shape[1])))
    return {
        "w1": pad2(w1, S, H1P).astype(jnp.bfloat16),
        "b1": jnp.pad(b1, (0, H1P - H1)).reshape(1, H1P),
        "w2": pad2(w2, H1P, H2P).astype(jnp.bfloat16),
        "b2": jnp.pad(b2, (0, H2P - H2)).reshape(1, H2P),
        "w3": pad2(w3, H2P, A),                # f32 (tiny, precision-critical)
        "b3": b3.reshape(1, A),
        "log_std": masters["log_std"],
    }


def _reference_f32(s, m):
    """Original-module math in f32 (unpadded, unquantized weights)."""
    h1 = jnp.maximum(s @ m["w1"] + m["b1"], 0.0)
    h2 = jnp.maximum(h1 @ m["w2"] + m["b2"], 0.0)
    mean = jnp.tanh(h2 @ m["w3"] + m["b3"])
    std = jnp.clip(jnp.exp(m["log_std"]), 0.001, 1.0)
    return mean, std


def _reference_bf16(s, p):
    """Mirrors the kernel's numerics: bf16 fc1/fc2 operands, f32 accumulation."""
    f32 = lambda x: x.astype(jnp.float32)
    bf = lambda x: x.astype(jnp.bfloat16).astype(jnp.float32)
    h1 = jnp.maximum(bf(s) @ f32(p["w1"]) + p["b1"], 0.0)
    h2 = jnp.maximum(bf(h1) @ f32(p["w2"]) + p["b2"], 0.0)
    mean = jnp.tanh(h2 @ p["w3"] + p["b3"])
    return mean


if __name__ == "__main__":
    key = jax.random.PRNGKey(0)
    k_param, k_in1, k_in2 = jax.random.split(key, 3)

    state_size = 32
    action_size = 8
    hidden1, hidden2 = 400, 300  # module defaults

    masters = init_actor_params(k_param, state_size, action_size, hidden1, hidden2)
    params = prepare_kernel_params(masters)

    # --- small batch (single grid step) ---
    batch = 8
    s = jax.random.normal(k_in1, (batch, state_size), jnp.float32)
    mean, std = actor_forward(s, params)
    jax.block_until_ready((mean, std))

    assert mean.shape == (batch, action_size)
    assert std.shape == (action_size,)

    mean_f = mean.astype(jnp.float32)
    mean_bf = _reference_bf16(s, params)
    mean_f32, std_f32 = _reference_f32(s, masters)
    assert jnp.allclose(mean_f, mean_bf, atol=5e-3, rtol=5e-2), \
        float(jnp.max(jnp.abs(mean_f - mean_bf)))
    assert jnp.allclose(mean_f, mean_f32, atol=5e-3, rtol=5e-2), \
        float(jnp.max(jnp.abs(mean_f - mean_f32)))
    assert jnp.allclose(std, std_f32, atol=1e-6, rtol=1e-6)

    # --- larger ragged batch (multiple grid steps + batch padding) ---
    batch2 = 2000  # pads to 2048 with batch_tile=1024 -> 2 parallel grid steps
    s2 = jax.random.normal(k_in2, (batch2, state_size), jnp.float32)
    mean2, std2 = actor_forward(s2, params, batch_tile=1024)
    jax.block_until_ready((mean2, std2))

    assert mean2.shape == (batch2, action_size)
    mean2_f = mean2.astype(jnp.float32)
    mean2_f32, _ = _reference_f32(s2, masters)
    assert jnp.allclose(mean2_f, mean2_f32, atol=5e-3, rtol=5e-2), \
        float(jnp.max(jnp.abs(mean2_f - mean2_f32)))
    assert jnp.allclose(std2, std_f32, atol=1e-6, rtol=1e-6)

    print("KERNEL_OK")
</pallas_src>

<mosaic_0001>
module attributes {stable_mosaic.version = 11 : i64} {
  func.func @_actor_kernel(%arg0: i32, %arg1: memref<16x32xf32, #tpu.memory_space<vmem>>, %arg2: memref<32x512xbf16, #tpu.memory_space<vmem>>, %arg3: memref<1x512xf32, #tpu.memory_space<vmem>>, %arg4: memref<512x384xbf16, #tpu.memory_space<vmem>>, %arg5: memref<1x384xf32, #tpu.memory_space<vmem>>, %arg6: memref<384x8xf32, #tpu.memory_space<vmem>>, %arg7: memref<1x8xf32, #tpu.memory_space<vmem>>, %arg8: memref<16x8xbf16, #tpu.memory_space<vmem>>) attributes {dimension_semantics = [#tpu.dimension_semantics<parallel>], iteration_bounds = array<i64: 1>, scalar_prefetch = 0 : i64, scratch_operands = 0 : i64, tpu.core_type = #tpu.core_type<tc>, window_params = [{transform_indices = @transform_0, window_bounds = array<i64: 16, 32>}, {pipeline_mode = #tpu.pipeline_mode<synchronous>, transform_indices = @transform_1, window_bounds = array<i64: 32, 512>}, {pipeline_mode = #tpu.pipeline_mode<synchronous>, transform_indices = @transform_2, window_bounds = array<i64: 1, 512>}, {pipeline_mode = #tpu.pipeline_mode<synchronous>, transform_indices = @transform_3, window_bounds = array<i64: 512, 384>}, {pipeline_mode = #tpu.pipeline_mode<synchronous>, transform_indices = @transform_4, window_bounds = array<i64: 1, 384>}, {pipeline_mode = #tpu.pipeline_mode<synchronous>, transform_indices = @transform_5, window_bounds = array<i64: 384, 8>}, {pipeline_mode = #tpu.pipeline_mode<synchronous>, transform_indices = @transform_6, window_bounds = array<i64: 1, 8>}, {transform_indices = @transform_7, window_bounds = array<i64: 16, 8>}]} {
    %c0 = arith.constant 0 : index
    %c0_0 = arith.constant 0 : index
    %0 = vector.load %arg1[%c0, %c0_0] : memref<16x32xf32, #tpu.memory_space<vmem>>, vector<16x32xf32>
    %1 = arith.truncf %0 : vector<16x32xf32> to vector<16x32xbf16>
    %c0_1 = arith.constant 0 : index
    %c0_2 = arith.constant 0 : index
    %2 = vector.load %arg2[%c0_1, %c0_2] : memref<32x512xbf16, #tpu.memory_space<vmem>>, vector<32x512xbf16>
    %cst = arith.constant dense<0.000000e+00> : vector<16x512xf32>
    %3 = tpu.matmul %1, %2, %cst {dimension_numbers = #tpu.dot_dimension_numbers<[1], [0], [0], [1], [0, 0, 1, 1], [], []>} : vector<16x32xbf16>, vector<32x512xbf16>, vector<16x512xf32> -> vector<16x512xf32>
    %c0_3 = arith.constant 0 : index
    %c0_4 = arith.constant 0 : index
    %4 = vector.load %arg3[%c0_3, %c0_4] : memref<1x512xf32, #tpu.memory_space<vmem>>, vector<1x512xf32>
    %5 = vector.broadcast %4 : vector<1x512xf32> to vector<16x512xf32>
    %6 = arith.addf %3, %5 : vector<16x512xf32>
    %cst_5 = arith.constant 0.000000e+00 : f32
    %7 = vector.broadcast %cst_5 : f32 to vector<16x512xf32>
    %8 = arith.maximumf %6, %7 : vector<16x512xf32>
    %9 = arith.truncf %8 : vector<16x512xf32> to vector<16x512xbf16>
    %c0_6 = arith.constant 0 : index
    %c0_7 = arith.constant 0 : index
    %10 = vector.load %arg4[%c0_6, %c0_7] : memref<512x384xbf16, #tpu.memory_space<vmem>>, vector<512x384xbf16>
    %cst_8 = arith.constant dense<0.000000e+00> : vector<16x384xf32>
    %11 = tpu.matmul %9, %10, %cst_8 {dimension_numbers = #tpu.dot_dimension_numbers<[1], [0], [0], [1], [0, 0, 1, 1], [], []>} : vector<16x512xbf16>, vector<512x384xbf16>, vector<16x384xf32> -> vector<16x384xf32>
    %c0_9 = arith.constant 0 : index
    %c0_10 = arith.constant 0 : index
    %12 = vector.load %arg5[%c0_9, %c0_10] : memref<1x384xf32, #tpu.memory_space<vmem>>, vector<1x384xf32>
    %13 = vector.broadcast %12 : vector<1x384xf32> to vector<16x384xf32>
    %14 = arith.addf %11, %13 : vector<16x384xf32>
    %cst_11 = arith.constant 0.000000e+00 : f32
    %15 = vector.broadcast %cst_11 : f32 to vector<16x384xf32>
    %16 = arith.maximumf %14, %15 : vector<16x384xf32>
    %c0_12 = arith.constant 0 : index
    %c0_13 = arith.constant 0 : index
    %17 = vector.load %arg6[%c0_12, %c0_13] : memref<384x8xf32, #tpu.memory_space<vmem>>, vector<384x8xf32>
    %cst_14 = arith.constant dense<0.000000e+00> : vector<16x8xf32>
    %18 = tpu.matmul %16, %17, %cst_14 {dimension_numbers = #tpu.dot_dimension_numbers<[1], [0], [0], [1], [0, 0, 1, 1], [], []>} : vector<16x384xf32>, vector<384x8xf32>, vector<16x8xf32> -> vector<16x8xf32>
    %c0_15 = arith.constant 0 : index
    %c0_16 = arith.constant 0 : index
    %19 = vector.load %arg7[%c0_15, %c0_16] : memref<1x8xf32, #tpu.memory_space<vmem>>, vector<1x8xf32>
    %20 = vector.broadcast %19 : vector<1x8xf32> to vector<16x8xf32>
    %21 = arith.addf %18, %20 : vector<16x8xf32>
    %22 = math.tanh %21 : vector<16x8xf32>
    %23 = arith.truncf %22 : vector<16x8xf32> to vector<16x8xbf16>
    %c0_17 = arith.constant 0 : index
    %c0_18 = arith.constant 0 : index
    %24 = vector.load %arg8[%c0_17, %c0_18] : memref<16x8xbf16, #tpu.memory_space<vmem>>, vector<16x8xbf16>
    tpu.vector_store %arg8[%c0_17, %c0_18], %23 {strides = array<i32>} : memref<16x8xbf16, #tpu.memory_space<vmem>>, vector<16x8xbf16>,
    return
  }
  func.func @transform_0(%arg0: i32) -> (i32, i32) {
    %c0_i32 = arith.constant 0 : i32
    %c0_i32_0 = arith.constant 0 : i32
    return %arg0, %c0_i32 : i32, i32
  }
  func.func @transform_1(%arg0: i32) -> (i32, i32) {
    %c0_i32 = arith.constant 0 : i32
    %c0_i32_0 = arith.constant 0 : i32
    %c0_i32_1 = arith.constant 0 : i32
    return %c0_i32, %c0_i32_0 : i32, i32
  }
  func.func @transform_2(%arg0: i32) -> (i32, i32) {
    %c0_i32 = arith.constant 0 : i32
    %c0_i32_0 = arith.constant 0 : i32
    %c0_i32_1 = arith.constant 0 : i32
    return %c0_i32, %c0_i32_0 : i32, i32
  }
  func.func @transform_3(%arg0: i32) -> (i32, i32) {
    %c0_i32 = arith.constant 0 : i32
    %c0_i32_0 = arith.constant 0 : i32
    %c0_i32_1 = arith.constant 0 : i32
    return %c0_i32, %c0_i32_0 : i32, i32
  }
  func.func @transform_4(%arg0: i32) -> (i32, i32) {
    %c0_i32 = arith.constant 0 : i32
    %c0_i32_0 = arith.constant 0 : i32
    %c0_i32_1 = arith.constant 0 : i32
    return %c0_i32, %c0_i32_0 : i32, i32
  }
  func.func @transform_5(%arg0: i32) -> (i32, i32) {
    %c0_i32 = arith.constant 0 : i32
    %c0_i32_0 = arith.constant 0 : i32
    %c0_i32_1 = arith.constant 0 : i32
    return %c0_i32, %c0_i32_0 : i32, i32
  }
  func.func @transform_6(%arg0: i32) -> (i32, i32) {
    %c0_i32 = arith.constant 0 : i32
    %c0_i32_0 = arith.constant 0 : i32
    %c0_i32_1 = arith.constant 0 : i32
    return %c0_i32, %c0_i32_0 : i32, i32
  }
  func.func @transform_7(%arg0: i32) -> (i32, i32) {
    %c0_i32 = arith.constant 0 : i32
    %c0_i32_0 = arith.constant 0 : i32
    return %arg0, %c0_i32 : i32, i32
  }
}

</mosaic_0001>

<llo_original>
// kernel: tpu_custom_call.1
$region0: #{tpu_custom_call.1}
  #allocation0 [shape = 'u32[]', space=smem, size = 0x4, offset = 0x4, fixed_abs, tag = 'smem constant byte address 0x4 - core index']
  #allocation1 [shape = 'u32[144,128]{1,0:T(1,128)}', space=vmem, size = 0x12000, scoped, tag = 'internal scratch']
  %s0 = inlined_call_operand.vmem [shape: f32[16,32], index: 0, kind: input, shape index: {}]
  %s1 = inlined_call_operand.vmem [shape: bf16[32,512], index: 1, kind: input, shape index: {}]
  %s2 = inlined_call_operand.vmem [shape: f32[1,512], index: 2, kind: input, shape index: {}]
  %s3 = inlined_call_operand.hbm [shape: bf16[512,384], index: 3, kind: input, shape index: {}]
  %s4 = inlined_call_operand.vmem [shape: f32[1,384], index: 4, kind: input, shape index: {}]
  %s5 = inlined_call_operand.vmem [shape: f32[384,8], index: 5, kind: input, shape index: {}]
  %s6 = inlined_call_operand.vmem [shape: f32[1,8], index: 6, kind: input, shape index: {}]
  %s7 = inlined_call_operand.vmem [shape: bf16[16,8], index: 7, kind: output, shape index: {}]
  %s8 = sld [smem:[#allocation0]]
  $region42: #{tpu_custom_call.1} parent=0
    _
  %s10 = ssub.s32 1, %s8
  %s11 = scalar_select 0, %s10, %s8
  $region1: #{tpu_custom_call.1} parent=0
    #allocation2 [shape = 'u8[393216]{0}', space=vmem, size = 0x60000, scoped, tag = 'input window, operand 3, single buffered']
    #allocation3 [shape = 's32[1]{0}', space=sflag, size = 0x4, scoped, tag = 'scoped memory for tpu_custom_call.1']
    %12 = vsyncpa [#allocation3], 0
    // Predicated region
    $region2: #{tpu_custom_call.1} parent=1 // pred_check
      _
    $region3: #{tpu_custom_call.1} parent=1 // pred_check_branch
      %14 = sbr.rel (0) target = $region5
    $region4: #{tpu_custom_call.1} parent=1 // pred_region
      _
    $region5: #{tpu_custom_call.1} parent=1 // pred_fallthru
      _
    // Predicated region
    $region6: #{tpu_custom_call.1} parent=1 // pred_check
      _
    $region7: #{tpu_custom_call.1} parent=1 // pred_check_branch
      %16 = sbr.rel (0) target = $region9
    $region8: #{tpu_custom_call.1} parent=1 // pred_region
      _
    $region9: #{tpu_custom_call.1} parent=1 // pred_fallthru
      _
    // Predicated region
    $region10: #{tpu_custom_call.1} parent=1 // pred_check
      _
    $region11: #{tpu_custom_call.1} parent=1 // pred_check_branch
      %18 = sbr.rel (0) target = $region13
    $region12: #{tpu_custom_call.1} parent=1 // pred_region
      _
    $region13: #{tpu_custom_call.1} parent=1 // pred_fallthru
      _
    // Predicated region
    $region14: #{tpu_custom_call.1} parent=1 // pred_check
      _
    $region15: #{tpu_custom_call.1} parent=1 // pred_check_branch
      %20 = sbr.rel (0) target = $region17
    $region16: #{tpu_custom_call.1} parent=1 // pred_region
      %s22 = ssub.s32 12288, 12288
      %23 = vsyncadd [#allocation3], %s22
      %s24 = sshll.u32 [#allocation2], 4
      %s25 = int_to_ptr.vmem [resolvable:$true] %s24
      %30 = dma.hbm_to_vmem [thread:$0]  %s3, 12288, %s25, [#allocation3], 192, 192, 12
    $region17: #{tpu_custom_call.1} parent=1 // pred_fallthru
      _
    // Predicated region
    $region18: #{tpu_custom_call.1} parent=1 // pred_check
      _
    $region19: #{tpu_custom_call.1} parent=1 // pred_check_branch
      %32 = sbr.rel (0) target = $region21
    $region20: #{tpu_custom_call.1} parent=1 // pred_region
      _
    $region21: #{tpu_custom_call.1} parent=1 // pred_fallthru
      _
    // Predicated region
    $region22: #{tpu_custom_call.1} parent=1 // pred_check
      _
    $region23: #{tpu_custom_call.1} parent=1 // pred_check_branch
      %34 = sbr.rel (0) target = $region25
    $region24: #{tpu_custom_call.1} parent=1 // pred_region
      _
    $region25: #{tpu_custom_call.1} parent=1 // pred_fallthru
      _
    // Predicated region
    $region26: #{tpu_custom_call.1} parent=1 // pred_check
      _
    $region27: #{tpu_custom_call.1} parent=1 // pred_check_branch
      %36 = sbr.rel (0) target = $region29
    $region28: #{tpu_custom_call.1} parent=1 // pred_region
      _
    $region29: #{tpu_custom_call.1} parent=1 // pred_fallthru
      _
    // Predicated region
    $region30: #{tpu_custom_call.1} parent=1 // pred_check
      _
    $region31: #{tpu_custom_call.1} parent=1 // pred_check_branch
      %38 = sbr.rel (0) target = $region33
    $region32: #{tpu_custom_call.1} parent=1 // pred_region
      %39 = dma.done [#allocation3], 12288
    $region33: #{tpu_custom_call.1} parent=1 // pred_fallthru
      _
    %v41 = vld [vmem:[%s0] sm:$0xff]
    %v42 = vld [vmem:[%s0 + $0x8] sm:$0xff]
    %v43 = vpack.c.bf16 %v42, %v41
    %v44 = vld [vmem:[%s1] sm:$0xff]
    %v45 = vld [vmem:[%s1 + $0x8] sm:$0xff]
    %v46 = vld [vmem:[%s1 + $0x10] sm:$0xff]
    %v47 = vld [vmem:[%s1 + $0x18] sm:$0xff]
    %v48 = vld [vmem:[%s1 + $0x20] sm:$0xff]
    %v49 = vld [vmem:[%s1 + $0x28] sm:$0xff]
    %v50 = vld [vmem:[%s1 + $0x30] sm:$0xff]
    %v51 = vld [vmem:[%s1 + $0x38] sm:$0xff]
    %v52 = vld [vmem:[%s2] sm:$0xf]
    %v54 = vlaneseq
    %v55 = vshrl.u32 %v54, 7
    %v56 = vsub.s32 0, %v55
    %v57 = vrot.slane %v52, %v56
    %v58 = vlaneseq
    %v59 = vshrl.u32 %v58, 7
    %v60 = vsub.s32 1, %v59
    %v61 = vrot.slane %v52, %v60
    %v62 = vlaneseq
    %v63 = vshrl.u32 %v62, 7
    %v64 = vsub.s32 2, %v63
    %v65 = vrot.slane %v52, %v64
    %v66 = vlaneseq
    %v67 = vshrl.u32 %v66, 7
    %v68 = vsub.s32 3, %v67
    %v69 = vrot.slane %v52, %v68
    %v82 = vunpack.c.l.b16 %v44
    %v83 = vunpack.c.h.b16 %v44
    %v84 = vunpack.c.l.b16 %v45
    %v85 = vunpack.c.h.b16 %v45
    %v86 = vunpack.c.l.b16 %v46
    %v87 = vunpack.c.h.b16 %v46
    %v88 = vunpack.c.l.b16 %v47
    %v89 = vunpack.c.h.b16 %v47
    %v90 = vunpack.c.l.b16 %v48
    %v91 = vunpack.c.h.b16 %v48
    %v92 = vunpack.c.l.b16 %v49
    %v93 = vunpack.c.h.b16 %v49
    %v94 = vunpack.c.l.b16 %v50
    %v95 = vunpack.c.h.b16 %v50
    %v96 = vunpack.c.l.b16 %v51
    %v97 = vunpack.c.h.b16 %v51
    %v98 = vpack.c.b16 %v86, %v82
    %v99 = vpack.c.b16 %v87, %v83
    %v100 = vpack.c.b16 %v88, %v84
    %v101 = vpack.c.b16 %v89, %v85
    %v102 = vpack.c.b16 %v94, %v90
    %v103 = vpack.c.b16 %v95, %v91
    %v104 = vpack.c.b16 %v96, %v92
    %v105 = vpack.c.b16 %v97, %v93
    %vm114 = vcmask 261120
    %v116 = vsel %vm114, %v43, 0
    %118 = vmatprep.subr.bf16.mxu0 0
    %119 = vmatpush1.bf16.msra.mxu0 0
    %120 = vmatprep.subr.bf16.mxu0 0
    %121 = vmatpush1.bf16.msra.mxu0 0
    %122 = vmatprep.subr.bf16.mxu0 0
    %123 = vmatpush1.bf16.msra.mxu0 0
    %124 = vmatprep.subr.bf16.mxu0 0
    %125 = vmatpush1.bf16.msra.mxu0 0
    %126 = vmatprep.subr.bf16.mxu0 0
    %127 = vmatpush1.bf16.msra.mxu0 0
    %128 = vmatprep.subr.bf16.mxu0 0
    %129 = vmatpush1.bf16.msra.mxu0 0
    %130 = vmatprep.subr.bf16.mxu0 %v103
    %131 = vmatpush1.bf16.msra.mxu0 %v102
    %132 = vmatprep.subr.bf16.mxu0 %v99
    %133 = vmatpush1.bf16.msra.mxu0 %v98
    %134 = vmatprep.subr.bf16.mxu0 0
    %135 = vmatpush2.bf16.msra.mxu0 0
    %136 = vmatprep.subr.bf16.mxu0 0
    %137 = vmatpush2.bf16.msra.mxu0 0
    %138 = vmatprep.subr.bf16.mxu0 0
    %139 = vmatpush2.bf16.msra.mxu0 0
    %140 = vmatprep.subr.bf16.mxu0 0
    %141 = vmatpush2.bf16.msra.mxu0 0
    %142 = vmatprep.subr.bf16.mxu0 0
    %143 = vmatpush2.bf16.msra.mxu0 0
    %144 = vmatprep.subr.bf16.mxu0 0
    %145 = vmatpush2.bf16.msra.mxu0 0
    %146 = vmatprep.subr.bf16.mxu0 0
    %147 = vmatpush2.bf16.msra.mxu0 0
    %148 = vmatprep.subr.bf16.mxu0 0
    %149 = vmatpush2.bf16.msra.mxu0 0
    %150 = vmatprep.mubr.bf16.mxu0 0
    %151 = vmatmul.mubr.bf16.gmra.mxu0 %v116
    %v152 = vpop.f32.mrf.mxu0
    %v153 = vadd.f32 %v57, %v152
    %v154 = vpop.f32.mrf.mxu0
    %v155 = vadd.f32 %v61, %v154
    %v156 = vpop.f32.mrf.mxu0
    %v157 = vadd.f32 %v57, %v156
    %v158 = vpop.f32.mrf.mxu0
    %v159 = vadd.f32 %v61, %v158
    %160 = vdwg.mxu0
    %161 = vmatprep.subr.bf16.mxu0 0
    %162 = vmatpush1.bf16.msra.mxu0 0
    %163 = vmatprep.subr.bf16.mxu0 0
    %164 = vmatpush1.bf16.msra.mxu0 0
    %165 = vmatprep.subr.bf16.mxu0 0
    %166 = vmatpush1.bf16.msra.mxu0 0
    %167 = vmatprep.subr.bf16.mxu0 0
    %168 = vmatpush1.bf16.msra.mxu0 0
    %169 = vmatprep.subr.bf16.mxu0 0
    %170 = vmatpush1.bf16.msra.mxu0 0
    %171 = vmatprep.subr.bf16.mxu0 0
    %172 = vmatpush1.bf16.msra.mxu0 0
    %173 = vmatprep.subr.bf16.mxu0 %v105
    %174 = vmatpush1.bf16.msra.mxu0 %v104
    %175 = vmatprep.subr.bf16.mxu0 %v101
    %176 = vmatpush1.bf16.msra.mxu0 %v100
    %177 = vmatprep.subr.bf16.mxu0 0
    %178 = vmatpush2.bf16.msra.mxu0 0
    %179 = vmatprep.subr.bf16.mxu0 0
    %180 = vmatpush2.bf16.msra.mxu0 0
    %181 = vmatprep.subr.bf16.mxu0 0
    %182 = vmatpush2.bf16.msra.mxu0 0
    %183 = vmatprep.subr.bf16.mxu0 0
    %184 = vmatpush2.bf16.msra.mxu0 0
    %185 = vmatprep.subr.bf16.mxu0 0
    %186 = vmatpush2.bf16.msra.mxu0 0
    %187 = vmatprep.subr.bf16.mxu0 0
    %188 = vmatpush2.bf16.msra.mxu0 0
    %189 = vmatprep.subr.bf16.mxu0 0
    %190 = vmatpush2.bf16.msra.mxu0 0
    %191 = vmatprep.subr.bf16.mxu0 0
    %192 = vmatpush2.bf16.msra.mxu0 0
    %193 = vmatprep.mubr.bf16.mxu0 0
    %194 = vmatmul.mubr.bf16.gmra.mxu0 %v116
    %v195 = vpop.f32.mrf.mxu0
    %v196 = vadd.f32 %v65, %v195
    %v197 = vpop.f32.mrf.mxu0
    %v198 = vadd.f32 %v69, %v197
    %v199 = vpop.f32.mrf.mxu0
    %v200 = vadd.f32 %v65, %v199
    %v201 = vpop.f32.mrf.mxu0
    %v202 = vadd.f32 %v69, %v201
    %203 = vdwg.mxu0
    %v204 = vmax.f32 %v153, 0.0
    %v205 = vmax.f32 %v155, 0.0
    %v206 = vmax.f32 %v196, 0.0
    %v207 = vmax.f32 %v198, 0.0
    %v208 = vmax.f32 %v157, 0.0
    %v209 = vmax.f32 %v159, 0.0
    %v210 = vmax.f32 %v200, 0.0
    %v211 = vmax.f32 %v202, 0.0
    %v212 = vpack.c.bf16 %v208, %v204
    %v213 = vpack.c.bf16 %v209, %v205
    %v214 = vpack.c.bf16 %v210, %v206
    %v215 = vpack.c.bf16 %v211, %v207
    %v216 = vld [vmem:[#allocation2] sm:$0xff]
    %v217 = vld [vmem:[#allocation2 + $0x8] sm:$0xf]
    %v218 = vld [vmem:[#allocation2 + $0xc] sm:$0xff]
    %v219 = vld [vmem:[#allocation2 + $0x14] sm:$0xf]
    %v220 = vld [vmem:[#allocation2 + $0x18] sm:$0xff]
    %v221 = vld [vmem:[#allocation2 + $0x20] sm:$0xf]
    %v222 = vld [vmem:[#allocation2 + $0x24] sm:$0xff]
    %v223 = vld [vmem:[#allocation2 + $0x2c] sm:$0xf]
    %v224 = vld [vmem:[#allocation2 + $0x30] sm:$0xff]
    %v225 = vld [vmem:[#allocation2 + $0x38] sm:$0xf]
    %v226 = vld [vmem:[#allocation2 + $0x3c] sm:$0xff]
    %v227 = vld [vmem:[#allocation2 + $0x44] sm:$0xf]
    %v228 = vld [vmem:[#allocation2 + $0x48] sm:$0xff]
    %v229 = vld [vmem:[#allocation2 + $0x50] sm:$0xf]
    %v230 = vld [vmem:[#allocation2 + $0x54] sm:$0xff]
    %v231 = vld [vmem:[#allocation2 + $0x5c] sm:$0xf]
    %v232 = vld [vmem:[#allocation2 + $0x60] sm:$0xff]
    %v233 = vld [vmem:[#allocation2 + $0x68] sm:$0xf]
    %v234 = vld [vmem:[#allocation2 + $0x6c] sm:$0xff]
    %v235 = vld [vmem:[#allocation2 + $0x74] sm:$0xf]
    %v236 = vld [vmem:[#allocation2 + $0x78] sm:$0xff]
    %v237 = vld [vmem:[#allocation2 + $0x80] sm:$0xf]
    %v238 = vld [vmem:[#allocation2 + $0x84] sm:$0xff]
    %v239 = vld [vmem:[#allocation2 + $0x8c] sm:$0xf]
    %v240 = vld [vmem:[#allocation2 + $0x90] sm:$0xff]
    %v241 = vld [vmem:[#allocation2 + $0x98] sm:$0xf]
    %v242 = vld [vmem:[#allocation2 + $0x9c] sm:$0xff]
    %v243 = vld [vmem:[#allocation2 + $0xa4] sm:$0xf]
    %v244 = vld [vmem:[#allocation2 + $0xa8] sm:$0xff]
    %v245 = vld [vmem:[#allocation2 + $0xb0] sm:$0xf]
    %v246 = vld [vmem:[#allocation2 + $0xb4] sm:$0xff]
    %v247 = vld [vmem:[#allocation2 + $0xbc] sm:$0xf]
    %v248 = vld [vmem:[#allocation2 + $0xc0] sm:$0xff]
    %v249 = vld [vmem:[#allocation2 + $0xc8] sm:$0xf]
    %v250 = vld [vmem:[#allocation2 + $0xcc] sm:$0xff]
    %v251 = vld [vmem:[#allocation2 + $0xd4] sm:$0xf]
    %v252 = vld [vmem:[#allocation2 + $0xd8] sm:$0xff]
    %v253 = vld [vmem:[#allocation2 + $0xe0] sm:$0xf]
    %v254 = vld [vmem:[#allocation2 + $0xe4] sm:$0xff]
    %v255 = vld [vmem:[#allocation2 + $0xec] sm:$0xf]
    %v256 = vld [vmem:[#allocation2 + $0xf0] sm:$0xff]
    %v257 = vld [vmem:[#allocation2 + $0xf8] sm:$0xf]
    %v258 = vld [vmem:[#allocation2 + $0xfc] sm:$0xff]
    %v259 = vld [vmem:[#allocation2 + $0x104] sm:$0xf]
    %v260 = vld [vmem:[#allocation2 + $0x108] sm:$0xff]
    %v261 = vld [vmem:[#allocation2 + $0x110] sm:$0xf]
    %v262 = vld [vmem:[#allocation2 + $0x114] sm:$0xff]
    %v263 = vld [vmem:[#allocation2 + $0x11c] sm:$0xf]
    %v264 = vld [vmem:[#allocation2 + $0x120] sm:$0xff]
    %v265 = vld [vmem:[#allocation2 + $0x128] sm:$0xf]
    %v266 = vld [vmem:[#allocation2 + $0x12c] sm:$0xff]
    %v267 = vld [vmem:[#allocation2 + $0x134] sm:$0xf]
    %v268 = vld [vmem:[#allocation2 + $0x138] sm:$0xff]
    %v269 = vld [vmem:[#allocation2 + $0x140] sm:$0xf]
    %v270 = vld [vmem:[#allocation2 + $0x144] sm:$0xff]
    %v271 = vld [vmem:[#allocation2 + $0x14c] sm:$0xf]
    %v272 = vld [vmem:[#allocation2 + $0x150] sm:$0xff]
    %v273 = vld [vmem:[#allocation2 + $0x158] sm:$0xf]
    %v274 = vld [vmem:[#allocation2 + $0x15c] sm:$0xff]
    %v275 = vld [vmem:[#allocation2 + $0x164] sm:$0xf]
    %v276 = vld [vmem:[#allocation2 + $0x168] sm:$0xff]
    %v277 = vld [vmem:[#allocation2 + $0x170] sm:$0xf]
    %v278 = vld [vmem:[#allocation2 + $0x174] sm:$0xff]
    %v279 = vld [vmem:[#allocation2 + $0x17c] sm:$0xf]
    %v280 = vld [vmem:[#allocation2 + $0x180] sm:$0xff]
    %v281 = vld [vmem:[#allocation2 + $0x188] sm:$0xf]
    %v282 = vld [vmem:[#allocation2 + $0x18c] sm:$0xff]
    %v283 = vld [vmem:[#allocation2 + $0x194] sm:$0xf]
    %v284 = vld [vmem:[#allocation2 + $0x198] sm:$0xff]
    %v285 = vld [vmem:[#allocation2 + $0x1a0] sm:$0xf]
    %v286 = vld [vmem:[#allocation2 + $0x1a4] sm:$0xff]
    %v287 = vld [vmem:[#allocation2 + $0x1ac] sm:$0xf]
    %v288 = vld [vmem:[#allocation2 + $0x1b0] sm:$0xff]
    %v289 = vld [vmem:[#allocation2 + $0x1b8] sm:$0xf]
    %v290 = vld [vmem:[#allocation2 + $0x1bc] sm:$0xff]
    %v291 = vld [vmem:[#allocation2 + $0x1c4] sm:$0xf]
    %v292 = vld [vmem:[#allocation2 + $0x1c8] sm:$0xff]
    %v293 = vld [vmem:[#allocation2 + $0x1d0] sm:$0xf]
    %v294 = vld [vmem:[#allocation2 + $0x1d4] sm:$0xff]
    %v295 = vld [vmem:[#allocation2 + $0x1dc] sm:$0xf]
    %v296 = vld [vmem:[#allocation2 + $0x1e0] sm:$0xff]
    %v297 = vld [vmem:[#allocation2 + $0x1e8] sm:$0xf]
    %v298 = vld [vmem:[#allocation2 + $0x1ec] sm:$0xff]
    %v299 = vld [vmem:[#allocation2 + $0x1f4] sm:$0xf]
    %v300 = vld [vmem:[#allocation2 + $0x1f8] sm:$0xff]
    %v301 = vld [vmem:[#allocation2 + $0x200] sm:$0xf]
    %v302 = vld [vmem:[#allocation2 + $0x204] sm:$0xff]
    %v303 = vld [vmem:[#allocation2 + $0x20c] sm:$0xf]
    %v304 = vld [vmem:[#allocation2 + $0x210] sm:$0xff]
    %v305 = vld [vmem:[#allocation2 + $0x218] sm:$0xf]
    %v306 = vld [vmem:[#allocation2 + $0x21c] sm:$0xff]
    %v307 = vld [vmem:[#allocation2 + $0x224] sm:$0xf]
    %v308 = vld [vmem:[#allocation2 + $0x228] sm:$0xff]
    %v309 = vld [vmem:[#allocation2 + $0x230] sm:$0xf]
    %v310 = vld [vmem:[#allocation2 + $0x234] sm:$0xff]
    %v311 = vld [vmem:[#allocation2 + $0x23c] sm:$0xf]
    %v312 = vld [vmem:[#allocation2 + $0x240] sm:$0xff]
    %v313 = vld [vmem:[#allocation2 + $0x248] sm:$0xf]
    %v314 = vld [vmem:[#allocation2 + $0x24c] sm:$0xff]
    %v315 = vld [vmem:[#allocation2 + $0x254] sm:$0xf]
    %v316 = vld [vmem:[#allocation2 + $0x258] sm:$0xff]
    %v317 = vld [vmem:[#allocation2 + $0x260] sm:$0xf]
    %v318 = vld [vmem:[#allocation2 + $0x264] sm:$0xff]
    %v319 = vld [vmem:[#allocation2 + $0x26c] sm:$0xf]
    %v320 = vld [vmem:[#allocation2 + $0x270] sm:$0xff]
    %v321 = vld [vmem:[#allocation2 + $0x278] sm:$0xf]
    %v322 = vld [vmem:[#allocation2 + $0x27c] sm:$0xff]
    %v323 = vld [vmem:[#allocation2 + $0x284] sm:$0xf]
    %v324 = vld [vmem:[#allocation2 + $0x288] sm:$0xff]
    %v325 = vld [vmem:[#allocation2 + $0x290] sm:$0xf]
    %v326 = vld [vmem:[#allocation2 + $0x294] sm:$0xff]
    %v327 = vld [vmem:[#allocation2 + $0x29c] sm:$0xf]
    %v328 = vld [vmem:[#allocation2 + $0x2a0] sm:$0xff]
    %v329 = vld [vmem:[#allocation2 + $0x2a8] sm:$0xf]
    %v330 = vld [vmem:[#allocation2 + $0x2ac] sm:$0xff]
    %v331 = vld [vmem:[#allocation2 + $0x2b4] sm:$0xf]
    %v332 = vld [vmem:[#allocation2 + $0x2b8] sm:$0xff]
    %v333 = vld [vmem:[#allocation2 + $0x2c0] sm:$0xf]
    %v334 = vld [vmem:[#allocation2 + $0x2c4] sm:$0xff]
    %v335 = vld [vmem:[#allocation2 + $0x2cc] sm:$0xf]
    %v336 = vld [vmem:[#allocation2 + $0x2d0] sm:$0xff]
    %v337 = vld [vmem:[#allocation2 + $0x2d8] sm:$0xf]
    %v338 = vld [vmem:[#allocation2 + $0x2dc] sm:$0xff]
    %v339 = vld [vmem:[#allocation2 + $0x2e4] sm:$0xf]
    %v340 = vld [vmem:[#allocation2 + $0x2e8] sm:$0xff]
    %v341 = vld [vmem:[#allocation2 + $0x2f0] sm:$0xf]
    %v342 = vld [vmem:[#allocation2 + $0x2f4] sm:$0xff]
    %v343 = vld [vmem:[#allocation2 + $0x2fc] sm:$0xf]
    %v344 = vld [vmem:[%s4] sm:$0x7]
    %v346 = vlaneseq
    %v347 = vshrl.u32 %v346, 7
    %v348 = vsub.s32 0, %v347
    %v349 = vrot.slane %v344, %v348
    %v350 = vlaneseq
    %v351 = vshrl.u32 %v350, 7
    %v352 = vsub.s32 1, %v351
    %v353 = vrot.slane %v344, %v352
    %v354 = vlaneseq
    %v355 = vshrl.u32 %v354, 7
    %v356 = vsub.s32 2, %v355
    %v357 = vrot.slane %v344, %v356
    %v489 = vunpack.c.l.b16 %v216
    %v490 = vunpack.c.h.b16 %v216
    %v491 = vunpack.c.l.b16 %v217
    %v492 = vunpack.c.l.b16 %v218
    %v493 = vunpack.c.h.b16 %v218
    %v494 = vunpack.c.l.b16 %v219
    %v495 = vunpack.c.l.b16 %v220
    %v496 = vunpack.c.h.b16 %v220
    %v497 = vunpack.c.l.b16 %v221
    %v498 = vunpack.c.l.b16 %v222
    %v499 = vunpack.c.h.b16 %v222
    %v500 = vunpack.c.l.b16 %v223
    %v501 = vunpack.c.l.b16 %v224
    %v502 = vunpack.c.h.b16 %v224
    %v503 = vunpack.c.l.b16 %v225
    %v504 = vunpack.c.l.b16 %v226
    %v505 = vunpack.c.h.b16 %v226
    %v506 = vunpack.c.l.b16 %v227
    %v507 = vunpack.c.l.b16 %v228
    %v508 = vunpack.c.h.b16 %v228
    %v509 = vunpack.c.l.b16 %v229
    %v510 = vunpack.c.l.b16 %v230
    %v511 = vunpack.c.h.b16 %v230
    %v512 = vunpack.c.l.b16 %v231
    %v513 = vunpack.c.l.b16 %v232
    %v514 = vunpack.c.h.b16 %v232
    %v515 = vunpack.c.l.b16 %v233
    %v516 = vunpack.c.l.b16 %v234
    %v517 = vunpack.c.h.b16 %v234
    %v518 = vunpack.c.l.b16 %v235
    %v519 = vunpack.c.l.b16 %v236
    %v520 = vunpack.c.h.b16 %v236
    %v521 = vunpack.c.l.b16 %v237
    %v522 = vunpack.c.l.b16 %v238
    %v523 = vunpack.c.h.b16 %v238
    %v524 = vunpack.c.l.b16 %v239
    %v525 = vunpack.c.l.b16 %v240
    %v526 = vunpack.c.h.b16 %v240
    %v527 = vunpack.c.l.b16 %v241
    %v528 = vunpack.c.l.b16 %v242
    %v529 = vunpack.c.h.b16 %v242
    %v530 = vunpack.c.l.b16 %v243
    %v531 = vunpack.c.l.b16 %v244
    %v532 = vunpack.c.h.b16 %v244
    %v533 = vunpack.c.l.b16 %v245
    %v534 = vunpack.c.l.b16 %v246
    %v535 = vunpack.c.h.b16 %v246
    %v536 = vunpack.c.l.b16 %v247
    %v537 = vunpack.c.l.b16 %v248
    %v538 = vunpack.c.h.b16 %v248
    %v539 = vunpack.c.l.b16 %v249
    %v540 = vunpack.c.l.b16 %v250
    %v541 = vunpack.c.h.b16 %v250
    %v542 = vunpack.c.l.b16 %v251
    %v543 = vunpack.c.l.b16 %v252
    %v544 = vunpack.c.h.b16 %v252
    %v545 = vunpack.c.l.b16 %v253
    %v546 = vunpack.c.l.b16 %v254
    %v547 = vunpack.c.h.b16 %v254
    %v548 = vunpack.c.l.b16 %v255
    %v549 = vunpack.c.l.b16 %v256
    %v550 = vunpack.c.h.b16 %v256
    %v551 = vunpack.c.l.b16 %v257
    %v552 = vunpack.c.l.b16 %v258
    %v553 = vunpack.c.h.b16 %v258
    %v554 = vunpack.c.l.b16 %v259
    %v555 = vunpack.c.l.b16 %v260
    %v556 = vunpack.c.h.b16 %v260
    %v557 = vunpack.c.l.b16 %v261
    %v558 = vunpack.c.l.b16 %v262
    %v559 = vunpack.c.h.b16 %v262
    %v560 = vunpack.c.l.b16 %v263
    %v561 = vunpack.c.l.b16 %v264
    %v562 = vunpack.c.h.b16 %v264
    %v563 = vunpack.c.l.b16 %v265
    %v564 = vunpack.c.l.b16 %v266
    %v565 = vunpack.c.h.b16 %v266
    %v566 = vunpack.c.l.b16 %v267
    %v567 = vunpack.c.l.b16 %v268
    %v568 = vunpack.c.h.b16 %v268
    %v569 = vunpack.c.l.b16 %v269
    %v570 = vunpack.c.l.b16 %v270
    %v571 = vunpack.c.h.b16 %v270
    %v572 = vunpack.c.l.b16 %v271
    %v573 = vunpack.c.l.b16 %v272
    %v574 = vunpack.c.h.b16 %v272
    %v575 = vunpack.c.l.b16 %v273
    %v576 = vunpack.c.l.b16 %v274
    %v577 = vunpack.c.h.b16 %v274
    %v578 = vunpack.c.l.b16 %v275
    %v579 = vunpack.c.l.b16 %v276
    %v580 = vunpack.c.h.b16 %v276
    %v581 = vunpack.c.l.b16 %v277
    %v582 = vunpack.c.l.b16 %v278
    %v583 = vunpack.c.h.b16 %v278
    %v584 = vunpack.c.l.b16 %v279
    %v585 = vunpack.c.l.b16 %v280
    %v586 = vunpack.c.h.b16 %v280
    %v587 = vunpack.c.l.b16 %v281
    %v588 = vunpack.c.l.b16 %v282
    %v589 = vunpack.c.h.b16 %v282
    %v590 = vunpack.c.l.b16 %v283
    %v591 = vunpack.c.l.b16 %v284
    %v592 = vunpack.c.h.b16 %v284
    %v593 = vunpack.c.l.b16 %v285
    %v594 = vunpack.c.l.b16 %v286
    %v595 = vunpack.c.h.b16 %v286
    %v596 = vunpack.c.l.b16 %v287
    %v597 = vunpack.c.l.b16 %v288
    %v598 = vunpack.c.h.b16 %v288
    %v599 = vunpack.c.l.b16 %v289
    %v600 = vunpack.c.l.b16 %v290
    %v601 = vunpack.c.h.b16 %v290
    %v602 = vunpack.c.l.b16 %v291
    %v603 = vunpack.c.l.b16 %v292
    %v604 = vunpack.c.h.b16 %v292
    %v605 = vunpack.c.l.b16 %v293
    %v606 = vunpack.c.l.b16 %v294
    %v607 = vunpack.c.h.b16 %v294
    %v608 = vunpack.c.l.b16 %v295
    %v609 = vunpack.c.l.b16 %v296
    %v610 = vunpack.c.h.b16 %v296
    %v611 = vunpack.c.l.b16 %v297
    %v612 = vunpack.c.l.b16 %v298
    %v613 = vunpack.c.h.b16 %v298
    %v614 = vunpack.c.l.b16 %v299
    %v615 = vunpack.c.l.b16 %v300
    %v616 = vunpack.c.h.b16 %v300
    %v617 = vunpack.c.l.b16 %v301
    %v618 = vunpack.c.l.b16 %v302
    %v619 = vunpack.c.h.b16 %v302
    %v620 = vunpack.c.l.b16 %v303
    %v621 = vunpack.c.l.b16 %v304
    %v622 = vunpack.c.h.b16 %v304
    %v623 = vunpack.c.l.b16 %v305
    %v624 = vunpack.c.l.b16 %v306
    %v625 = vunpack.c.h.b16 %v306
    %v626 = vunpack.c.l.b16 %v307
    %v627 = vunpack.c.l.b16 %v308
    %v628 = vunpack.c.h.b16 %v308
    %v629 = vunpack.c.l.b16 %v309
    %v630 = vunpack.c.l.b16 %v310
    %v631 = vunpack.c.h.b16 %v310
    %v632 = vunpack.c.l.b16 %v311
    %v633 = vunpack.c.l.b16 %v312
    %v634 = vunpack.c.h.b16 %v312
    %v635 = vunpack.c.l.b16 %v313
    %v636 = vunpack.c.l.b16 %v314
    %v637 = vunpack.c.h.b16 %v314
    %v638 = vunpack.c.l.b16 %v315
    %v639 = vunpack.c.l.b16 %v316
    %v640 = vunpack.c.h.b16 %v316
    %v641 = vunpack.c.l.b16 %v317
    %v642 = vunpack.c.l.b16 %v318
    %v643 = vunpack.c.h.b16 %v318
    %v644 = vunpack.c.l.b16 %v319
    %v645 = vunpack.c.l.b16 %v320
    %v646 = vunpack.c.h.b16 %v320
    %v647 = vunpack.c.l.b16 %v321
    %v648 = vunpack.c.l.b16 %v322
    %v649 = vunpack.c.h.b16 %v322
    %v650 = vunpack.c.l.b16 %v323
    %v651 = vunpack.c.l.b16 %v324
    %v652 = vunpack.c.h.b16 %v324
    %v653 = vunpack.c.l.b16 %v325
    %v654 = vunpack.c.l.b16 %v326
    %v655 = vunpack.c.h.b16 %v326
    %v656 = vunpack.c.l.b16 %v327
    %v657 = vunpack.c.l.b16 %v328
    %v658 = vunpack.c.h.b16 %v328
    %v659 = vunpack.c.l.b16 %v329
    %v660 = vunpack.c.l.b16 %v330
    %v661 = vunpack.c.h.b16 %v330
    %v662 = vunpack.c.l.b16 %v331
    %v663 = vunpack.c.l.b16 %v332
    %v664 = vunpack.c.h.b16 %v332
    %v665 = vunpack.c.l.b16 %v333
    %v666 = vunpack.c.l.b16 %v334
    %v667 = vunpack.c.h.b16 %v334
    %v668 = vunpack.c.l.b16 %v335
    %v669 = vunpack.c.l.b16 %v336
    %v670 = vunpack.c.h.b16 %v336
    %v671 = vunpack.c.l.b16 %v337
    %v672 = vunpack.c.l.b16 %v338
    %v673 = vunpack.c.h.b16 %v338
    %v674 = vunpack.c.l.b16 %v339
    %v675 = vunpack.c.l.b16 %v340
    %v676 = vunpack.c.h.b16 %v340
    %v677 = vunpack.c.l.b16 %v341
    %v678 = vunpack.c.l.b16 %v342
    %v679 = vunpack.c.h.b16 %v342
    %v680 = vunpack.c.l.b16 %v343
    %v681 = vpack.c.b16 %v492, %v489
    %v682 = vpack.c.b16 %v493, %v490
    %v683 = vpack.c.b16 %v494, %v491
    %v684 = vpack.c.b16 %v498, %v495
    %v685 = vpack.c.b16 %v499, %v496
    %v686 = vpack.c.b16 %v500, %v497
    %v687 = vpack.c.b16 %v504, %v501
    %v688 = vpack.c.b16 %v505, %v502
    %v689 = vpack.c.b16 %v506, %v503
    %v690 = vpack.c.b16 %v510, %v507
    %v691 = vpack.c.b16 %v511, %v508
    %v692 = vpack.c.b16 %v512, %v509
    %v693 = vpack.c.b16 %v516, %v513
    %v694 = vpack.c.b16 %v517, %v514
    %v695 = vpack.c.b16 %v518, %v515
    %v696 = vpack.c.b16 %v522, %v519
    %v697 = vpack.c.b16 %v523, %v520
    %v698 = vpack.c.b16 %v524, %v521
    %v699 = vpack.c.b16 %v528, %v525
    %v700 = vpack.c.b16 %v529, %v526
    %v701 = vpack.c.b16 %v530, %v527
    %v702 = vpack.c.b16 %v534, %v531
    %v703 = vpack.c.b16 %v535, %v532
    %v704 = vpack.c.b16 %v536, %v533
    %v705 = vpack.c.b16 %v540, %v537
    %v706 = vpack.c.b16 %v541, %v538
    %v707 = vpack.c.b16 %v542, %v539
    %v708 = vpack.c.b16 %v546, %v543
    %v709 = vpack.c.b16 %v547, %v544
    %v710 = vpack.c.b16 %v548, %v545
    %v711 = vpack.c.b16 %v552, %v549
    %v712 = vpack.c.b16 %v553, %v550
    %v713 = vpack.c.b16 %v554, %v551
    %v714 = vpack.c.b16 %v558, %v555
    %v715 = vpack.c.b16 %v559, %v556
    %v716 = vpack.c.b16 %v560, %v557
    %v717 = vpack.c.b16 %v564, %v561
    %v718 = vpack.c.b16 %v565, %v562
    %v719 = vpack.c.b16 %v566, %v563
    %v720 = vpack.c.b16 %v570, %v567
    %v721 = vpack.c.b16 %v571, %v568
    %v722 = vpack.c.b16 %v572, %v569
    %v723 = vpack.c.b16 %v576, %v573
    %v724 = vpack.c.b16 %v577, %v574
    %v725 = vpack.c.b16 %v578, %v575
    %v726 = vpack.c.b16 %v582, %v579
    %v727 = vpack.c.b16 %v583, %v580
    %v728 = vpack.c.b16 %v584, %v581
    %v729 = vpack.c.b16 %v588, %v585
    %v730 = vpack.c.b16 %v589, %v586
    %v731 = vpack.c.b16 %v590, %v587
    %v732 = vpack.c.b16 %v594, %v591
    %v733 = vpack.c.b16 %v595, %v592
    %v734 = vpack.c.b16 %v596, %v593
    %v735 = vpack.c.b16 %v600, %v597
    %v736 = vpack.c.b16 %v601, %v598
    %v737 = vpack.c.b16 %v602, %v599
    %v738 = vpack.c.b16 %v606, %v603
    %v739 = vpack.c.b16 %v607, %v604
    %v740 = vpack.c.b16 %v608, %v605
    %v741 = vpack.c.b16 %v612, %v609
    %v742 = vpack.c.b16 %v613, %v610
    %v743 = vpack.c.b16 %v614, %v611
    %v744 = vpack.c.b16 %v618, %v615
    %v745 = vpack.c.b16 %v619, %v616
    %v746 = vpack.c.b16 %v620, %v617
    %v747 = vpack.c.b16 %v624, %v621
    %v748 = vpack.c.b16 %v625, %v622
    %v749 = vpack.c.b16 %v626, %v623
    %v750 = vpack.c.b16 %v630, %v627
    %v751 = vpack.c.b16 %v631, %v628
    %v752 = vpack.c.b16 %v632, %v629
    %v753 = vpack.c.b16 %v636, %v633
    %v754 = vpack.c.b16 %v637, %v634
    %v755 = vpack.c.b16 %v638, %v635
    %v756 = vpack.c.b16 %v642, %v639
    %v757 = vpack.c.b16 %v643, %v640
    %v758 = vpack.c.b16 %v644, %v641
    %v759 = vpack.c.b16 %v648, %v645
    %v760 = vpack.c.b16 %v649, %v646
    %v761 = vpack.c.b16 %v650, %v647
    %v762 = vpack.c.b16 %v654, %v651
    %v763 = vpack.c.b16 %v655, %v652
    %v764 = vpack.c.b16 %v656, %v653
    %v765 = vpack.c.b16 %v660, %v657
    %v766 = vpack.c.b16 %v661, %v658
    %v767 = vpack.c.b16 %v662, %v659
    %v768 = vpack.c.b16 %v666, %v663
    %v769 = vpack.c.b16 %v667, %v664
    %v770 = vpack.c.b16 %v668, %v665
    %v771 = vpack.c.b16 %v672, %v669
    %v772 = vpack.c.b16 %v673, %v670
    %v773 = vpack.c.b16 %v674, %v671
    %v774 = vpack.c.b16 %v678, %v675
    %v775 = vpack.c.b16 %v679, %v676
    %v776 = vpack.c.b16 %v680, %v677
    %873 = vmatprep.subr.bf16.mxu0 %v703
    %874 = vmatpush1.bf16.msra.mxu0 %v702
    %875 = vmatprep.subr.bf16.mxu0 %v700
    %876 = vmatpush1.bf16.msra.mxu0 %v699
    %877 = vmatprep.subr.bf16.mxu0 %v697
    %878 = vmatpush1.bf16.msra.mxu0 %v696
    %879 = vmatprep.subr.bf16.mxu0 %v694
    %880 = vmatpush1.bf16.msra.mxu0 %v693
    %881 = vmatprep.subr.bf16.mxu0 %v691
    %882 = vmatpush1.bf16.msra.mxu0 %v690
    %883 = vmatprep.subr.bf16.mxu0 %v688
    %884 = vmatpush1.bf16.msra.mxu0 %v687
    %885 = vmatprep.subr.bf16.mxu0 %v685
    %886 = vmatpush1.bf16.msra.mxu0 %v684
    %887 = vmatprep.subr.bf16.mxu0 %v682
    %888 = vmatpush1.bf16.msra.mxu0 %v681
    %889 = vmatprep.subr.bf16.mxu0 %v727
    %890 = vmatpush2.bf16.msra.mxu0 %v726
    %891 = vmatprep.subr.bf16.mxu0 %v724
    %892 = vmatpush2.bf16.msra.mxu0 %v723
    %893 = vmatprep.subr.bf16.mxu0 %v721
    %894 = vmatpush2.bf16.msra.mxu0 %v720
    %895 = vmatprep.subr.bf16.mxu0 %v718
    %896 = vmatpush2.bf16.msra.mxu0 %v717
    %897 = vmatprep.subr.bf16.mxu0 %v715
    %898 = vmatpush2.bf16.msra.mxu0 %v714
    %899 = vmatprep.subr.bf16.mxu0 %v712
    %900 = vmatpush2.bf16.msra.mxu0 %v711
    %901 = vmatprep.subr.bf16.mxu0 %v709
    %902 = vmatpush2.bf16.msra.mxu0 %v708
    %903 = vmatprep.subr.bf16.mxu0 %v706
    %904 = vmatpush2.bf16.msra.mxu0 %v705
    %905 = vmatprep.mubr.bf16.mxu0 %v213
    %906 = vmatmul.mubr.bf16.gmra.mxu0 %v212
    %v907 = vpop.f32.mrf.mxu0
    %v908 = vadd.f32 %v349, %v907
    %v909 = vpop.f32.mrf.mxu0
    %v910 = vadd.f32 %v353, %v909
    %v911 = vpop.f32.mrf.mxu0
    %v912 = vadd.f32 %v349, %v911
    %v913 = vpop.f32.mrf.mxu0
    %v914 = vadd.f32 %v353, %v913
    %915 = vdwg.mxu0
    %916 = vmatprep.subr.bf16.mxu0 %v751
    %917 = vmatpush1.bf16.msra.mxu0 %v750
    %918 = vmatprep.subr.bf16.mxu0 %v748
    %919 = vmatpush1.bf16.msra.mxu0 %v747
    %920 = vmatprep.subr.bf16.mxu0 %v745
    %921 = vmatpush1.bf16.msra.mxu0 %v744
    %922 = vmatprep.subr.bf16.mxu0 %v742
    %923 = vmatpush1.bf16.msra.mxu0 %v741
    %924 = vmatprep.subr.bf16.mxu0 %v739
    %925 = vmatpush1.bf16.msra.mxu0 %v738
    %926 = vmatprep.subr.bf16.mxu0 %v736
    %927 = vmatpush1.bf16.msra.mxu0 %v735
    %928 = vmatprep.subr.bf16.mxu0 %v733
    %929 = vmatpush1.bf16.msra.mxu0 %v732
    %930 = vmatprep.subr.bf16.mxu0 %v730
    %931 = vmatpush1.bf16.msra.mxu0 %v729
    %932 = vmatprep.subr.bf16.mxu0 %v775
    %933 = vmatpush2.bf16.msra.mxu0 %v774
    %934 = vmatprep.subr.bf16.mxu0 %v772
    %935 = vmatpush2.bf16.msra.mxu0 %v771
    %936 = vmatprep.subr.bf16.mxu0 %v769
    %937 = vmatpush2.bf16.msra.mxu0 %v768
    %938 = vmatprep.subr.bf16.mxu0 %v766
    %939 = vmatpush2.bf16.msra.mxu0 %v765
    %940 = vmatprep.subr.bf16.mxu0 %v763
    %941 = vmatpush2.bf16.msra.mxu0 %v762
    %942 = vmatprep.subr.bf16.mxu0 %v760
    %943 = vmatpush2.bf16.msra.mxu0 %v759
    %944 = vmatprep.subr.bf16.mxu0 %v757
    %945 = vmatpush2.bf16.msra.mxu0 %v756
    %946 = vmatprep.subr.bf16.mxu0 %v754
    %947 = vmatpush2.bf16.msra.mxu0 %v753
    %948 = vmatprep.mubr.bf16.mxu0 %v215
    %949 = vmatmul.mubr.bf16.gmra.mxu0 %v214
    %v950 = vpop.f32.mrf.mxu0
    %v951 = vadd.f32 %v908, %v950
    %v952 = vpop.f32.mrf.mxu0
    %v953 = vadd.f32 %v910, %v952
    %v954 = vpop.f32.mrf.mxu0
    %v955 = vadd.f32 %v912, %v954
    %v956 = vpop.f32.mrf.mxu0
    %v957 = vadd.f32 %v914, %v956
    %958 = vdwg.mxu0
    %959 = vmatprep.subr.bf16.mxu0 0
    %960 = vmatpush1.bf16.msra.mxu0 %v704
    %961 = vmatprep.subr.bf16.mxu0 0
    %962 = vmatpush1.bf16.msra.mxu0 %v701
    %963 = vmatprep.subr.bf16.mxu0 0
    %964 = vmatpush1.bf16.msra.mxu0 %v698
    %965 = vmatprep.subr.bf16.mxu0 0
    %966 = vmatpush1.bf16.msra.mxu0 %v695
    %967 = vmatprep.subr.bf16.mxu0 0
    %968 = vmatpush1.bf16.msra.mxu0 %v692
    %969 = vmatprep.subr.bf16.mxu0 0
    %970 = vmatpush1.bf16.msra.mxu0 %v689
    %971 = vmatprep.subr.bf16.mxu0 0
    %972 = vmatpush1.bf16.msra.mxu0 %v686
    %973 = vmatprep.subr.bf16.mxu0 0
    %974 = vmatpush1.bf16.msra.mxu0 %v683
    %975 = vmatprep.subr.bf16.mxu0 0
    %976 = vmatpush2.bf16.msra.mxu0 %v728
    %977 = vmatprep.subr.bf16.mxu0 0
    %978 = vmatpush2.bf16.msra.mxu0 %v725
    %979 = vmatprep.subr.bf16.mxu0 0
    %980 = vmatpush2.bf16.msra.mxu0 %v722
    %981 = vmatprep.subr.bf16.mxu0 0
    %982 = vmatpush2.bf16.msra.mxu0 %v719
    %983 = vmatprep.subr.bf16.mxu0 0
    %984 = vmatpush2.bf16.msra.mxu0 %v716
    %985 = vmatprep.subr.bf16.mxu0 0
    %986 = vmatpush2.bf16.msra.mxu0 %v713
    %987 = vmatprep.subr.bf16.mxu0 0
    %988 = vmatpush2.bf16.msra.mxu0 %v710
    %989 = vmatprep.subr.bf16.mxu0 0
    %990 = vmatpush2.bf16.msra.mxu0 %v707
    %991 = vmatprep.mubr.bf16.mxu0 %v213
    %992 = vmatmul.mubr.bf16.gmra.mxu0 %v212
    %v993 = vpop.f32.mrf.mxu0
    %v994 = vadd.f32 %v357, %v993
    %v995 = vpop.f32.mrf.mxu0
    %v996 = vpop.f32.mrf.mxu0
    %v997 = vadd.f32 %v357, %v996
    %v998 = vpop.f32.mrf.mxu0
    %999 = vdwg.mxu0
    %1000 = vmatprep.subr.bf16.mxu0 0
    %1001 = vmatpush1.bf16.msra.mxu0 %v752
    %1002 = vmatprep.subr.bf16.mxu0 0
    %1003 = vmatpush1.bf16.msra.mxu0 %v749
    %1004 = vmatprep.subr.bf16.mxu0 0
    %1005 = vmatpush1.bf16.msra.mxu0 %v746
    %1006 = vmatprep.subr.bf16.mxu0 0
    %1007 = vmatpush1.bf16.msra.mxu0 %v743
    %1008 = vmatprep.subr.bf16.mxu0 0
    %1009 = vmatpush1.bf16.msra.mxu0 %v740
    %1010 = vmatprep.subr.bf16.mxu0 0
    %1011 = vmatpush1.bf16.msra.mxu0 %v737
    %1012 = vmatprep.subr.bf16.mxu0 0
    %1013 = vmatpush1.bf16.msra.mxu0 %v734
    %1014 = vmatprep.subr.bf16.mxu0 0
    %1015 = vmatpush1.bf16.msra.mxu0 %v731
    %1016 = vmatprep.subr.bf16.mxu0 0
    %1017 = vmatpush2.bf16.msra.mxu0 %v776
    %1018 = vmatprep.subr.bf16.mxu0 0
    %1019 = vmatpush2.bf16.msra.mxu0 %v773
    %1020 = vmatprep.subr.bf16.mxu0 0
    %1021 = vmatpush2.bf16.msra.mxu0 %v770
    %1022 = vmatprep.subr.bf16.mxu0 0
    %1023 = vmatpush2.bf16.msra.mxu0 %v767
    %1024 = vmatprep.subr.bf16.mxu0 0
    %1025 = vmatpush2.bf16.msra.mxu0 %v764
    %1026 = vmatprep.subr.bf16.mxu0 0
    %1027 = vmatpush2.bf16.msra.mxu0 %v761
    %1028 = vmatprep.subr.bf16.mxu0 0
    %1029 = vmatpush2.bf16.msra.mxu0 %v758
    %1030 = vmatprep.subr.bf16.mxu0 0
    %1031 = vmatpush2.bf16.msra.mxu0 %v755
    %1032 = vmatprep.mubr.bf16.mxu0 %v215
    %1033 = vmatmul.mubr.bf16.gmra.mxu0 %v214
    %v1034 = vpop.f32.mrf.mxu0
    %v1035 = vadd.f32 %v994, %v1034
    %v1036 = vpop.f32.mrf.mxu0
    %v1037 = vpop.f32.mrf.mxu0
    %v1038 = vadd.f32 %v997, %v1037
    %v1039 = vpop.f32.mrf.mxu0
    %1040 = vdwg.mxu0
    %v1041 = vmax.f32 %v951, 0.0
    %v1042 = vmax.f32 %v953, 0.0
    %v1043 = vmax.f32 %v1035, 0.0
    %v1044 = vmax.f32 %v955, 0.0
    %v1045 = vmax.f32 %v957, 0.0
    %v1046 = vmax.f32 %v1038, 0.0
    %v1047 = vld [vmem:[%s5] sm:$0xff]
    %v1048 = vld [vmem:[%s5 + $0x8] sm:$0xff]
    %v1049 = vld [vmem:[%s5 + $0x10] sm:$0xff]
    %v1050 = vld [vmem:[%s5 + $0x18] sm:$0xff]
    %v1051 = vld [vmem:[%s5 + $0x20] sm:$0xff]
    %v1052 = vld [vmem:[%s5 + $0x28] sm:$0xff]
    %v1053 = vld [vmem:[%s5 + $0x30] sm:$0xff]
    %v1054 = vld [vmem:[%s5 + $0x38] sm:$0xff]
    %v1055 = vld [vmem:[%s5 + $0x40] sm:$0xff]
    %v1056 = vld [vmem:[%s5 + $0x48] sm:$0xff]
    %v1057 = vld [vmem:[%s5 + $0x50] sm:$0xff]
    %v1058 = vld [vmem:[%s5 + $0x58] sm:$0xff]
    %v1059 = vld [vmem:[%s5 + $0x60] sm:$0xff]
    %v1060 = vld [vmem:[%s5 + $0x68] sm:$0xff]
    %v1061 = vld [vmem:[%s5 + $0x70] sm:$0xff]
    %v1062 = vld [vmem:[%s5 + $0x78] sm:$0xff]
    %v1063 = vld [vmem:[%s5 + $0x80] sm:$0xff]
    %v1064 = vld [vmem:[%s5 + $0x88] sm:$0xff]
    %v1065 = vld [vmem:[%s5 + $0x90] sm:$0xff]
    %v1066 = vld [vmem:[%s5 + $0x98] sm:$0xff]
    %v1067 = vld [vmem:[%s5 + $0xa0] sm:$0xff]
    %v1068 = vld [vmem:[%s5 + $0xa8] sm:$0xff]
    %v1069 = vld [vmem:[%s5 + $0xb0] sm:$0xff]
    %v1070 = vld [vmem:[%s5 + $0xb8] sm:$0xff]
    %v1071 = vld [vmem:[%s5 + $0xc0] sm:$0xff]
    %v1072 = vld [vmem:[%s5 + $0xc8] sm:$0xff]
    %v1073 = vld [vmem:[%s5 + $0xd0] sm:$0xff]
    %v1074 = vld [vmem:[%s5 + $0xd8] sm:$0xff]
    %v1075 = vld [vmem:[%s5 + $0xe0] sm:$0xff]
    %v1076 = vld [vmem:[%s5 + $0xe8] sm:$0xff]
    %v1077 = vld [vmem:[%s5 + $0xf0] sm:$0xff]
    %v1078 = vld [vmem:[%s5 + $0xf8] sm:$0xff]
    %v1079 = vld [vmem:[%s5 + $0x100] sm:$0xff]
    %v1080 = vld [vmem:[%s5 + $0x108] sm:$0xff]
    %v1081 = vld [vmem:[%s5 + $0x110] sm:$0xff]
    %v1082 = vld [vmem:[%s5 + $0x118] sm:$0xff]
    %v1083 = vld [vmem:[%s5 + $0x120] sm:$0xff]
    %v1084 = vld [vmem:[%s5 + $0x128] sm:$0xff]
    %v1085 = vld [vmem:[%s5 + $0x130] sm:$0xff]
    %v1086 = vld [vmem:[%s5 + $0x138] sm:$0xff]
    %v1087 = vld [vmem:[%s5 + $0x140] sm:$0xff]
    %v1088 = vld [vmem:[%s5 + $0x148] sm:$0xff]
    %v1089 = vld [vmem:[%s5 + $0x150] sm:$0xff]
    %v1090 = vld [vmem:[%s5 + $0x158] sm:$0xff]
    %v1091 = vld [vmem:[%s5 + $0x160] sm:$0xff]
    %v1092 = vld [vmem:[%s5 + $0x168] sm:$0xff]
    %v1093 = vld [vmem:[%s5 + $0x170] sm:$0xff]
    %v1094 = vld [vmem:[%s5 + $0x178] sm:$0xff]
    %v1095 = vld [vmem:[%s6] sm:$0x1]
    %v1097 = vlaneseq
    %v1098 = vshrl.u32 %v1097, 7
    %v1099 = vsub.s32 0, %v1098
    %v1100 = vrot.slane %v1095, %v1099
    %1102 = vmatprep.subr.mxu0 0.0
    %1103 = vmatpush1.msra.mxu0 %v1062
    %1104 = vmatprep.subr.mxu0 0.0
    %1105 = vmatpush1.msra.mxu0 %v1061
    %1106 = vmatprep.subr.mxu0 0.0
    %1107 = vmatpush1.msra.mxu0 %v1060
    %1108 = vmatprep.subr.mxu0 0.0
    %1109 = vmatpush1.msra.mxu0 %v1059
    %1110 = vmatprep.subr.mxu0 0.0
    %1111 = vmatpush1.msra.mxu0 %v1058
    %1112 = vmatprep.subr.mxu0 0.0
    %1113 = vmatpush1.msra.mxu0 %v1057
    %1114 = vmatprep.subr.mxu0 0.0
    %1115 = vmatpush1.msra.mxu0 %v1056
    %1116 = vmatprep.subr.mxu0 0.0
    %1117 = vmatpush1.msra.mxu0 %v1055
    %1118 = vmatprep.subr.mxu0 0.0
    %1119 = vmatpush1.msra.mxu0 %v1054
    %1120 = vmatprep.subr.mxu0 0.0
    %1121 = vmatpush1.msra.mxu0 %v1053
    %1122 = vmatprep.subr.mxu0 0.0
    %1123 = vmatpush1.msra.mxu0 %v1052
    %1124 = vmatprep.subr.mxu0 0.0
    %1125 = vmatpush1.msra.mxu0 %v1051
    %1126 = vmatprep.subr.mxu0 0.0
    %1127 = vmatpush1.msra.mxu0 %v1050
    %1128 = vmatprep.subr.mxu0 0.0
    %1129 = vmatpush1.msra.mxu0 %v1049
    %1130 = vmatprep.subr.mxu0 0.0
    %1131 = vmatpush1.msra.mxu0 %v1048
    %1132 = vmatprep.subr.mxu0 0.0
    %1133 = vmatpush1.msra.mxu0 %v1047
    %1134 = vmatprep.subr.mxu0 0.0
    %1135 = vmatpush2.msra.mxu0 %v1078
    %1136 = vmatprep.subr.mxu0 0.0
    %1137 = vmatpush2.msra.mxu0 %v1077
    %1138 = vmatprep.subr.mxu0 0.0
    %1139 = vmatpush2.msra.mxu0 %v1076
    %1140 = vmatprep.subr.mxu0 0.0
    %1141 = vmatpush2.msra.mxu0 %v1075
    %1142 = vmatprep.subr.mxu0 0.0
    %1143 = vmatpush2.msra.mxu0 %v1074
    %1144 = vmatprep.subr.mxu0 0.0
    %1145 = vmatpush2.msra.mxu0 %v1073
    %1146 = vmatprep.subr.mxu0 0.0
    %1147 = vmatpush2.msra.mxu0 %v1072
    %1148 = vmatprep.subr.mxu0 0.0
    %1149 = vmatpush2.msra.mxu0 %v1071
    %1150 = vmatprep.subr.mxu0 0.0
    %1151 = vmatpush2.msra.mxu0 %v1070
    %1152 = vmatprep.subr.mxu0 0.0
    %1153 = vmatpush2.msra.mxu0 %v1069
    %1154 = vmatprep.subr.mxu0 0.0
    %1155 = vmatpush2.msra.mxu0 %v1068
    %1156 = vmatprep.subr.mxu0 0.0
    %1157 = vmatpush2.msra.mxu0 %v1067
    %1158 = vmatprep.subr.mxu0 0.0
    %1159 = vmatpush2.msra.mxu0 %v1066
    %1160 = vmatprep.subr.mxu0 0.0
    %1161 = vmatpush2.msra.mxu0 %v1065
    %1162 = vmatprep.subr.mxu0 0.0
    %1163 = vmatpush2.msra.mxu0 %v1064
    %1164 = vmatprep.subr.mxu0 0.0
    %1165 = vmatpush2.msra.mxu0 %v1063
    %1166 = vmatprep.mubr.f32.mxu0 %v1042
    %1167 = vmatmul.mubr.f32.gmra.mxu0 %v1041
    %v1168 = vpop.f32.mrf.mxu0
    %v1169 = vadd.f32 %v1100, %v1168
    %v1170 = vpop.f32.mrf.mxu0
    %1171 = vmatprep.mubr.f32.mxu0 %v1045
    %1172 = vmatmul.mubr.f32.gmra.mxu0 %v1044
    %v1173 = vpop.f32.mrf.mxu0
    %v1174 = vadd.f32 %v1100, %v1173
    %v1175 = vpop.f32.mrf.mxu0
    %1176 = vdwg.mxu0
    %1177 = vmatprep.subr.mxu0 0.0
    %1178 = vmatpush1.msra.mxu0 %v1094
    %1179 = vmatprep.subr.mxu0 0.0
    %1180 = vmatpush1.msra.mxu0 %v1093
    %1181 = vmatprep.subr.mxu0 0.0
    %1182 = vmatpush1.msra.mxu0 %v1092
    %1183 = vmatprep.subr.mxu0 0.0
    %1184 = vmatpush1.msra.mxu0 %v1091
    %1185 = vmatprep.subr.mxu0 0.0
    %1186 = vmatpush1.msra.mxu0 %v1090
    %1187 = vmatprep.subr.mxu0 0.0
    %1188 = vmatpush1.msra.mxu0 %v1089
    %1189 = vmatprep.subr.mxu0 0.0
    %1190 = vmatpush1.msra.mxu0 %v1088
    %1191 = vmatprep.subr.mxu0 0.0
    %1192 = vmatpush1.msra.mxu0 %v1087
    %1193 = vmatprep.subr.mxu0 0.0
    %1194 = vmatpush1.msra.mxu0 %v1086
    %1195 = vmatprep.subr.mxu0 0.0
    %1196 = vmatpush1.msra.mxu0 %v1085
    %1197 = vmatprep.subr.mxu0 0.0
    %1198 = vmatpush1.msra.mxu0 %v1084
    %1199 = vmatprep.subr.mxu0 0.0
    %1200 = vmatpush1.msra.mxu0 %v1083
    %1201 = vmatprep.subr.mxu0 0.0
    %1202 = vmatpush1.msra.mxu0 %v1082
    %1203 = vmatprep.subr.mxu0 0.0
    %1204 = vmatpush1.msra.mxu0 %v1081
    %1205 = vmatprep.subr.mxu0 0.0
    %1206 = vmatpush1.msra.mxu0 %v1080
    %1207 = vmatprep.subr.mxu0 0.0
    %1208 = vmatpush1.msra.mxu0 %v1079
    %1209 = vmatprep.subr.mxu0 0.0
    %1210 = vmatpush2.msra.mxu0 0.0
    %1211 = vmatprep.subr.mxu0 0.0
    %1212 = vmatpush2.msra.mxu0 0.0
    %1213 = vmatprep.subr.mxu0 0.0
    %1214 = vmatpush2.msra.mxu0 0.0
    %1215 = vmatprep.subr.mxu0 0.0
    %1216 = vmatpush2.msra.mxu0 0.0
    %1217 = vmatprep.subr.mxu0 0.0
    %1218 = vmatpush2.msra.mxu0 0.0
    %1219 = vmatprep.subr.mxu0 0.0
    %1220 = vmatpush2.msra.mxu0 0.0
    %1221 = vmatprep.subr.mxu0 0.0
    %1222 = vmatpush2.msra.mxu0 0.0
    %1223 = vmatprep.subr.mxu0 0.0
    %1224 = vmatpush2.msra.mxu0 0.0
    %1225 = vmatprep.subr.mxu0 0.0
    %1226 = vmatpush2.msra.mxu0 0.0
    %1227 = vmatprep.subr.mxu0 0.0
    %1228 = vmatpush2.msra.mxu0 0.0
    %1229 = vmatprep.subr.mxu0 0.0
    %1230 = vmatpush2.msra.mxu0 0.0
    %1231 = vmatprep.subr.mxu0 0.0
    %1232 = vmatpush2.msra.mxu0 0.0
    %1233 = vmatprep.subr.mxu0 0.0
    %1234 = vmatpush2.msra.mxu0 0.0
    %1235 = vmatprep.subr.mxu0 0.0
    %1236 = vmatpush2.msra.mxu0 0.0
    %1237 = vmatprep.subr.mxu0 0.0
    %1238 = vmatpush2.msra.mxu0 0.0
    %1239 = vmatprep.subr.mxu0 0.0
    %1240 = vmatpush2.msra.mxu0 0.0
    %1241 = vmatprep.mubr.f32.mxu0 0.0
    %1242 = vmatmul.mubr.f32.gmra.mxu0 %v1043
    %v1243 = vpop.f32.mrf.mxu0
    %v1244 = vadd.f32 %v1169, %v1243
    %v1245 = vpop.f32.mrf.mxu0
    %1246 = vmatprep.mubr.f32.mxu0 0.0
    %1247 = vmatmul.mubr.f32.gmra.mxu0 %v1046
    %v1248 = vpop.f32.mrf.mxu0
    %v1249 = vadd.f32 %v1174, %v1248
    %v1250 = vpop.f32.mrf.mxu0
    %1251 = vdwg.mxu0
    %v1252 = vtanh.pop %v1244
    %v1253 = vtanh.pop %v1249
    %v1254 = vpack.c.bf16 %v1253, %v1252
    %v1256 = vunpack.c.l.b16 %v1254
    %v1257 = vunpack.c.h.b16 %v1254
    %v1258 = vpack.c.b16 %v1256, %v1256
    %v1259 = vpack.c.b16 %v1257, %v1257
    %vm1262 = vcmask 60416
    %1263 = vst.msk [vmem:[%s7] sm:$0xf] %vm1262, %v1258
    %1264 = vst.msk [vmem:[%s7 + $0x4] sm:$0xf] %vm1262, %v1259
    // Predicated region
    $region34: #{tpu_custom_call.1} parent=1 // pred_check
      _
    $region35: #{tpu_custom_call.1} parent=1 // pred_check_branch
      %1266 = sbr.rel (0) target = $region37
    $region36: #{tpu_custom_call.1} parent=1 // pred_region
      _
    $region37: #{tpu_custom_call.1} parent=1 // pred_fallthru
      _
    // Predicated region
    $region38: #{tpu_custom_call.1} parent=1 // pred_check
      _
    $region39: #{tpu_custom_call.1} parent=1 // pred_check_branch
      %1268 = sbr.rel (0) target = $region41
    $region40: #{tpu_custom_call.1} parent=1 // pred_region
      _
    $region41: #{tpu_custom_call.1} parent=1 // pred_fallthru
      _
    %1269 = vsyncpa [#allocation3], 1

</llo_original>
